<compile_context>
chip_gen: v6e
topology: v6e:2x2x1
jax: 0.10.0
libtpu: 0.0.40
codegen_flags: <defaults>
</compile_context>

<pallas_src>
import numpy as np
import jax
import jax.numpy as jnp
from jax.experimental import pallas as pl
from jax.experimental.pallas import tpu as pltpu

INPUT_DIM = 16
HIDDEN_DIMS = [32, 64, 32]
EPS = 1e-5          # nn.LayerNorm default eps
PAD = 128           # lane-dense feature padding


def _round_up(x, m):
    return ((x + m - 1) // m) * m


# ----------------------------------------------------------------------------
# Parameter / mask construction (deterministic, in-script)
# ----------------------------------------------------------------------------
def make_params_and_masks(key):
    # --- masks (create_masks with ordering=None, deterministic numpy RNG) ---
    rng = np.random.RandomState(0)
    ordering = np.arange(INPUT_DIM)
    m_prev = ordering
    masks_W = []
    for h_dim in HIDDEN_DIMS:
        min_prev = int(m_prev.min())
        m_curr = rng.randint(min_prev, INPUT_DIM, size=(h_dim,))
        masks_W.append((m_curr[:, None] >= m_prev[None, :]).astype(np.float32))
        m_prev = m_curr
    mask_V = (ordering[:, None] > m_prev[None, :]).astype(np.float32)
    mask_A = np.tril(np.ones((INPUT_DIM, INPUT_DIM), np.float32), -1)

    # --- parameters (nn.Linear-style uniform init, deterministic) ---
    params = {"layers": [], "adapters": [], "lns": []}
    prev = INPUT_DIM
    keys = jax.random.split(key, 4 * len(HIDDEN_DIMS) + 4)
    ki = 0
    for h_dim in HIDDEN_DIMS:
        bound = 1.0 / np.sqrt(prev)
        W = jax.random.uniform(keys[ki], (h_dim, prev), jnp.float32, -bound, bound); ki += 1
        b = jax.random.uniform(keys[ki], (h_dim,), jnp.float32, -bound, bound); ki += 1
        params["layers"].append((W, b))
        if prev != h_dim:
            Wa = jax.random.uniform(keys[ki], (h_dim, prev), jnp.float32, -bound, bound); ki += 1
            ba = jax.random.uniform(keys[ki], (h_dim,), jnp.float32, -bound, bound); ki += 1
            params["adapters"].append((Wa, ba))
        else:
            params["adapters"].append(None)
            ki += 2
        # nn.LayerNorm default init: weight=1, bias=0
        params["lns"].append((jnp.ones((h_dim,), jnp.float32),
                              jnp.zeros((h_dim,), jnp.float32)))
        prev = h_dim
    bound = 1.0 / np.sqrt(prev)
    Wout = jax.random.uniform(keys[ki], (INPUT_DIM, prev), jnp.float32, -bound, bound); ki += 1
    bout = jax.random.uniform(keys[ki], (INPUT_DIM,), jnp.float32, -bound, bound); ki += 1
    bound_d = 1.0 / np.sqrt(INPUT_DIM)
    Wdir = jax.random.uniform(keys[ki], (INPUT_DIM, INPUT_DIM), jnp.float32,
                              -bound_d, bound_d); ki += 1
    params["out"] = (Wout, bout)
    params["direct"] = Wdir
    return params, (masks_W, mask_V, mask_A)


# ----------------------------------------------------------------------------
# Operand building: mask, transpose, zero-pad to 128 lanes, fuse matmuls
# ----------------------------------------------------------------------------
def build_kernel_operands(params, masks):
    masks_W, mask_V, mask_A = masks
    ops = []
    used_adapter = []
    prev = INPUT_DIM
    for i, h_dim in enumerate(HIDDEN_DIMS):
        W, b = params["layers"][i]
        Wm_t = (W * jnp.asarray(masks_W[i])).T                 # (prev, h_dim)
        gamma, beta = params["lns"][i]
        use_a = (i % 2 == 0) and (params["adapters"][i] is not None)
        used_adapter.append(use_a)
        if use_a:
            # Fused [W | Wa] weight: one MXU pass produces [z_pre | residual].
            Wa, ba = params["adapters"][i]
            Wcat = jnp.zeros((PAD, 2 * PAD), jnp.float32)
            Wcat = Wcat.at[:prev, :h_dim].set(Wm_t)
            Wcat = Wcat.at[:prev, PAD:PAD + h_dim].set(Wa.T)
            bcat = jnp.zeros((1, 2 * PAD), jnp.float32)
            bcat = bcat.at[0, :h_dim].set(b)
            bcat = bcat.at[0, PAD:PAD + h_dim].set(ba)
            ops += [Wcat, bcat]
        else:
            Wp = jnp.zeros((PAD, PAD), jnp.float32).at[:prev, :h_dim].set(Wm_t)
            bp = jnp.zeros((1, PAD), jnp.float32).at[0, :h_dim].set(b)
            ops += [Wp, bp]
        # gamma/beta padded with ZEROS so padded lanes stay exactly 0 after LN
        gp = jnp.zeros((1, PAD), jnp.float32).at[0, :h_dim].set(gamma)
        bep = jnp.zeros((1, PAD), jnp.float32).at[0, :h_dim].set(beta)
        ops += [gp, bep]
        prev = h_dim

    # Fused output weight: [Wout_masked ; Wdir_masked] consumed by concat([h,x])
    Wout, bout = params["out"]
    Wdir = params["direct"]
    Wo_t = (Wout * jnp.asarray(mask_V)).T                      # (prev, D)
    Wd_t = (Wdir * jnp.asarray(mask_A)).T                      # (D, D)
    Wcat_out = jnp.zeros((2 * PAD, PAD), jnp.float32)
    Wcat_out = Wcat_out.at[:prev, :INPUT_DIM].set(Wo_t)
    Wcat_out = Wcat_out.at[PAD:PAD + INPUT_DIM, :INPUT_DIM].set(Wd_t)
    bo = jnp.zeros((1, PAD), jnp.float32).at[0, :INPUT_DIM].set(bout)
    ops += [Wcat_out, bo]
    return ops, used_adapter


# ----------------------------------------------------------------------------
# Pallas kernel: whole MADE forward (fused matmuls + relu + layernorm + resid)
# ----------------------------------------------------------------------------
def make_kernel(hidden_dims, used_adapter):
    def kernel(x_ref, *refs):
        out_ref = refs[-1]
        prefs = refs[:-1]
        x = x_ref[...]                      # (tile_b, PAD), padded lanes == 0
        h = x
        idx = 0
        for i, h_dim in enumerate(hidden_dims):
            fused = (i % 2 == 0) and used_adapter[i]
            W = prefs[idx][...]
            b = prefs[idx + 1][...]
            g = prefs[idx + 2][...]
            be = prefs[idx + 3][...]
            idx += 4
            zz = jnp.dot(h, W, preferred_element_type=jnp.float32) + b
            if fused:
                z = zz[:, :PAD]             # main branch (pre-activation)
                res = zz[:, PAD:]           # adapter(residual) — residual src == h here
            else:
                z = zz
                res = h                     # identity residual (only if ever used)
            z = jnp.maximum(z, 0.0)         # ReLU
            # dropout: eval-mode identity
            # LayerNorm over the true h_dim lanes (padded lanes are exactly 0)
            inv_d = 1.0 / float(h_dim)
            mean = jnp.sum(z, axis=-1, keepdims=True) * inv_d
            lane = jax.lax.broadcasted_iota(jnp.int32, (1, PAD), 1)
            centered = jnp.where(lane < h_dim, z - mean, 0.0)
            var = jnp.sum(centered * centered, axis=-1, keepdims=True) * inv_d
            z = centered * jax.lax.rsqrt(var + EPS) * g + be
            if i % 2 == 0:
                z = z + res
            h = z
        # Fused output: concat([h, x]) @ [Wout ; Wdir] + bout  (single MXU pass)
        Wo = prefs[idx][...]
        bo = prefs[idx + 1][...]
        hx = jnp.concatenate([h, x], axis=-1)          # (tile_b, 2*PAD)
        out_ref[...] = jnp.dot(hx, Wo, preferred_element_type=jnp.float32) + bo

    return kernel


def made_forward(x, operands, used_adapter, tile_b=256):
    x2d = x.reshape(-1, INPUT_DIM).astype(jnp.float32)
    B = x2d.shape[0]
    tb = min(tile_b, _round_up(B, 8))                  # sublane-aligned batch tile
    Bp = _round_up(B, tb)
    # zero-pad batch to a tile multiple and features to 128 lanes
    xp = jnp.zeros((Bp, PAD), jnp.float32).at[:B, :INPUT_DIM].set(x2d)

    kernel = make_kernel(HIDDEN_DIMS, used_adapter)

    def const_spec(op):
        nd = op.ndim
        return pl.BlockSpec(op.shape, lambda i, _nd=nd: (0,) * _nd)

    in_specs = [pl.BlockSpec((tb, PAD), lambda i: (i, 0))]
    in_specs += [const_spec(op) for op in operands]    # weights resident in VMEM
    out_spec = pl.BlockSpec((tb, PAD), lambda i: (i, 0))

    out = pl.pallas_call(
        kernel,
        out_shape=jax.ShapeDtypeStruct((Bp, PAD), jnp.float32),
        grid=(Bp // tb,),
        in_specs=in_specs,
        out_specs=out_spec,
        compiler_params=pltpu.CompilerParams(
            dimension_semantics=("parallel",),          # v7x: 2 TCs split the batch
            vmem_limit_bytes=32 * 1024 * 1024),         # tiny footprint; stays under v7x 64 MiB
    )(xp, *operands)
    return out[:B, :INPUT_DIM]


# ----------------------------------------------------------------------------
# Plain-JAX reference (for correctness check)
# ----------------------------------------------------------------------------
def reference(x, params, masks):
    masks_W, mask_V, mask_A = masks
    x = x.reshape(-1, INPUT_DIM)
    h = x
    h_prev = x
    for i, _ in enumerate(HIDDEN_DIMS):
        W, b = params["layers"][i]
        z = h @ (W * jnp.asarray(masks_W[i])).T + b
        z = jax.nn.relu(z)
        gamma, beta = params["lns"][i]
        mean = z.mean(-1, keepdims=True)
        var = ((z - mean) ** 2).mean(-1, keepdims=True)
        z = (z - mean) / jnp.sqrt(var + EPS) * gamma + beta
        if i % 2 == 0:
            residual = x if i == 0 else h_prev
            if params["adapters"][i] is not None:
                Wa, ba = params["adapters"][i]
                residual = residual @ Wa.T + ba
            z = z + residual
        h_prev = z
        h = z
    Wout, bout = params["out"]
    logits = h @ (Wout * jnp.asarray(mask_V)).T + bout
    logits = logits + x @ (params["direct"] * jnp.asarray(mask_A)).T
    return logits


if __name__ == "__main__":
    key = jax.random.PRNGKey(0)
    pkey, xkey = jax.random.split(key)
    params, masks = make_params_and_masks(pkey)
    operands, used_adapter = build_kernel_operands(params, masks)

    # small input; forward flattens to (-1, input_dim) -> (8, 16)
    x = jax.random.normal(xkey, (2, 4, INPUT_DIM), jnp.float32)

    out = made_forward(x, operands, used_adapter)
    out = jax.block_until_ready(out)

    ref = jax.block_until_ready(reference(x, params, masks))
    assert out.shape == (8, INPUT_DIM)
    np.testing.assert_allclose(np.asarray(out), np.asarray(ref),
                               rtol=1e-3, atol=1e-3)
    print("KERNEL_OK")
</pallas_src>

<mosaic_0001>
module attributes {stable_mosaic.version = 11 : i64} {
  func.func @kernel(%arg0: i32, %arg1: memref<8x128xf32, #tpu.memory_space<vmem>>, %arg2: memref<128x256xf32, #tpu.memory_space<vmem>>, %arg3: memref<1x256xf32, #tpu.memory_space<vmem>>, %arg4: memref<1x128xf32, #tpu.memory_space<vmem>>, %arg5: memref<1x128xf32, #tpu.memory_space<vmem>>, %arg6: memref<128x128xf32, #tpu.memory_space<vmem>>, %arg7: memref<1x128xf32, #tpu.memory_space<vmem>>, %arg8: memref<1x128xf32, #tpu.memory_space<vmem>>, %arg9: memref<1x128xf32, #tpu.memory_space<vmem>>, %arg10: memref<128x256xf32, #tpu.memory_space<vmem>>, %arg11: memref<1x256xf32, #tpu.memory_space<vmem>>, %arg12: memref<1x128xf32, #tpu.memory_space<vmem>>, %arg13: memref<1x128xf32, #tpu.memory_space<vmem>>, %arg14: memref<256x128xf32, #tpu.memory_space<vmem>>, %arg15: memref<1x128xf32, #tpu.memory_space<vmem>>, %arg16: memref<8x128xf32, #tpu.memory_space<vmem>>) attributes {dimension_semantics = [#tpu.dimension_semantics<parallel>], iteration_bounds = array<i64: 1>, scalar_prefetch = 0 : i64, scratch_operands = 0 : i64, tpu.core_type = #tpu.core_type<tc>, window_params = [{transform_indices = @transform_0, window_bounds = array<i64: 8, 128>}, {pipeline_mode = #tpu.pipeline_mode<synchronous>, transform_indices = @transform_1, window_bounds = array<i64: 128, 256>}, {pipeline_mode = #tpu.pipeline_mode<synchronous>, transform_indices = @transform_2, window_bounds = array<i64: 1, 256>}, {pipeline_mode = #tpu.pipeline_mode<synchronous>, transform_indices = @transform_3, window_bounds = array<i64: 1, 128>}, {pipeline_mode = #tpu.pipeline_mode<synchronous>, transform_indices = @transform_4, window_bounds = array<i64: 1, 128>}, {pipeline_mode = #tpu.pipeline_mode<synchronous>, transform_indices = @transform_5, window_bounds = array<i64: 128, 128>}, {pipeline_mode = #tpu.pipeline_mode<synchronous>, transform_indices = @transform_6, window_bounds = array<i64: 1, 128>}, {pipeline_mode = #tpu.pipeline_mode<synchronous>, transform_indices = @transform_7, window_bounds = array<i64: 1, 128>}, {pipeline_mode = #tpu.pipeline_mode<synchronous>, transform_indices = @transform_8, window_bounds = array<i64: 1, 128>}, {pipeline_mode = #tpu.pipeline_mode<synchronous>, transform_indices = @transform_9, window_bounds = array<i64: 128, 256>}, {pipeline_mode = #tpu.pipeline_mode<synchronous>, transform_indices = @transform_10, window_bounds = array<i64: 1, 256>}, {pipeline_mode = #tpu.pipeline_mode<synchronous>, transform_indices = @transform_11, window_bounds = array<i64: 1, 128>}, {pipeline_mode = #tpu.pipeline_mode<synchronous>, transform_indices = @transform_12, window_bounds = array<i64: 1, 128>}, {pipeline_mode = #tpu.pipeline_mode<synchronous>, transform_indices = @transform_13, window_bounds = array<i64: 256, 128>}, {pipeline_mode = #tpu.pipeline_mode<synchronous>, transform_indices = @transform_14, window_bounds = array<i64: 1, 128>}, {transform_indices = @transform_15, window_bounds = array<i64: 8, 128>}]} {
    %c0 = arith.constant 0 : index
    %c0_0 = arith.constant 0 : index
    %0 = vector.load %arg1[%c0, %c0_0] : memref<8x128xf32, #tpu.memory_space<vmem>>, vector<8x128xf32>
    %c0_1 = arith.constant 0 : index
    %c0_2 = arith.constant 0 : index
    %1 = vector.load %arg2[%c0_1, %c0_2] : memref<128x256xf32, #tpu.memory_space<vmem>>, vector<128x256xf32>
    %c0_3 = arith.constant 0 : index
    %c0_4 = arith.constant 0 : index
    %2 = vector.load %arg3[%c0_3, %c0_4] : memref<1x256xf32, #tpu.memory_space<vmem>>, vector<1x256xf32>
    %c0_5 = arith.constant 0 : index
    %c0_6 = arith.constant 0 : index
    %3 = vector.load %arg4[%c0_5, %c0_6] : memref<1x128xf32, #tpu.memory_space<vmem>>, vector<1x128xf32>
    %c0_7 = arith.constant 0 : index
    %c0_8 = arith.constant 0 : index
    %4 = vector.load %arg5[%c0_7, %c0_8] : memref<1x128xf32, #tpu.memory_space<vmem>>, vector<1x128xf32>
    %cst = arith.constant dense<0.000000e+00> : vector<8x256xf32>
    %5 = tpu.matmul %0, %1, %cst {dimension_numbers = #tpu.dot_dimension_numbers<[1], [0], [0], [1], [0, 0, 1, 1], [], []>} : vector<8x128xf32>, vector<128x256xf32>, vector<8x256xf32> -> vector<8x256xf32>
    %6 = vector.broadcast %2 : vector<1x256xf32> to vector<8x256xf32>
    %7 = arith.addf %5, %6 : vector<8x256xf32>
    %8 = vector.extract_strided_slice %7 {offsets = [0, 0], sizes = [8, 128], strides = [1, 1]} : vector<8x256xf32> to vector<8x128xf32>
    %9 = vector.extract_strided_slice %7 {offsets = [0, 128], sizes = [8, 128], strides = [1, 1]} : vector<8x256xf32> to vector<8x128xf32>
    %cst_9 = arith.constant 0.000000e+00 : f32
    %10 = vector.broadcast %cst_9 : f32 to vector<8x128xf32>
    %11 = arith.maximumf %8, %10 : vector<8x128xf32>
    %cst_10 = arith.constant dense<0.000000e+00> : vector<8xf32>
    %12 = vector.multi_reduction <add>, %11, %cst_10 [1] : vector<8x128xf32> to vector<8xf32>
    %13 = vector.shape_cast %12 : vector<8xf32> to vector<8x1xf32>
    %cst_11 = arith.constant 3.125000e-02 : f32
    %14 = vector.broadcast %cst_11 : f32 to vector<8x1xf32>
    %15 = arith.mulf %13, %14 : vector<8x1xf32>
    %16 = tpu.iota {dimensions = array<i32: 1>} : vector<1x128xi32>
    %c32_i32 = arith.constant 32 : i32
    %17 = vector.broadcast %c32_i32 : i32 to vector<1x128xi32>
    %18 = arith.cmpi slt, %16, %17 : vector<1x128xi32>
    %19 = vector.broadcast %15 : vector<8x1xf32> to vector<8x128xf32>
    %20 = arith.subf %11, %19 : vector<8x128xf32>
    %cst_12 = arith.constant 0.000000e+00 : f32
    %21 = vector.shape_cast %18 : vector<1x128xi1> to vector<1x128xi1>
    %22 = vector.broadcast %21 : vector<1x128xi1> to vector<8x128xi1>
    %23 = vector.broadcast %cst_12 : f32 to vector<8x128xf32>
    %24 = arith.select %22, %20, %23 : vector<8x128xi1>, vector<8x128xf32>
    %25 = arith.mulf %24, %24 : vector<8x128xf32>
    %cst_13 = arith.constant dense<0.000000e+00> : vector<8xf32>
    %26 = vector.multi_reduction <add>, %25, %cst_13 [1] : vector<8x128xf32> to vector<8xf32>
    %27 = vector.shape_cast %26 : vector<8xf32> to vector<8x1xf32>
    %cst_14 = arith.constant 3.125000e-02 : f32
    %28 = vector.broadcast %cst_14 : f32 to vector<8x1xf32>
    %29 = arith.mulf %27, %28 : vector<8x1xf32>
    %cst_15 = arith.constant 9.99999974E-6 : f32
    %30 = vector.broadcast %cst_15 : f32 to vector<8x1xf32>
    %31 = arith.addf %29, %30 : vector<8x1xf32>
    %32 = math.rsqrt %31 : vector<8x1xf32>
    %33 = vector.broadcast %32 : vector<8x1xf32> to vector<8x128xf32>
    %34 = arith.mulf %24, %33 : vector<8x128xf32>
    %35 = vector.broadcast %3 : vector<1x128xf32> to vector<8x128xf32>
    %36 = arith.mulf %34, %35 : vector<8x128xf32>
    %37 = vector.broadcast %4 : vector<1x128xf32> to vector<8x128xf32>
    %38 = arith.addf %36, %37 : vector<8x128xf32>
    %39 = arith.addf %38, %9 : vector<8x128xf32>
    %c0_16 = arith.constant 0 : index
    %c0_17 = arith.constant 0 : index
    %40 = vector.load %arg6[%c0_16, %c0_17] : memref<128x128xf32, #tpu.memory_space<vmem>>, vector<128x128xf32>
    %c0_18 = arith.constant 0 : index
    %c0_19 = arith.constant 0 : index
    %41 = vector.load %arg7[%c0_18, %c0_19] : memref<1x128xf32, #tpu.memory_space<vmem>>, vector<1x128xf32>
    %c0_20 = arith.constant 0 : index
    %c0_21 = arith.constant 0 : index
    %42 = vector.load %arg8[%c0_20, %c0_21] : memref<1x128xf32, #tpu.memory_space<vmem>>, vector<1x128xf32>
    %c0_22 = arith.constant 0 : index
    %c0_23 = arith.constant 0 : index
    %43 = vector.load %arg9[%c0_22, %c0_23] : memref<1x128xf32, #tpu.memory_space<vmem>>, vector<1x128xf32>
    %cst_24 = arith.constant dense<0.000000e+00> : vector<8x128xf32>
    %44 = tpu.matmul %39, %40, %cst_24 {dimension_numbers = #tpu.dot_dimension_numbers<[1], [0], [0], [1], [0, 0, 1, 1], [], []>} : vector<8x128xf32>, vector<128x128xf32>, vector<8x128xf32> -> vector<8x128xf32>
    %45 = vector.broadcast %41 : vector<1x128xf32> to vector<8x128xf32>
    %46 = arith.addf %44, %45 : vector<8x128xf32>
    %cst_25 = arith.constant 0.000000e+00 : f32
    %47 = vector.broadcast %cst_25 : f32 to vector<8x128xf32>
    %48 = arith.maximumf %46, %47 : vector<8x128xf32>
    %cst_26 = arith.constant dense<0.000000e+00> : vector<8xf32>
    %49 = vector.multi_reduction <add>, %48, %cst_26 [1] : vector<8x128xf32> to vector<8xf32>
    %50 = vector.shape_cast %49 : vector<8xf32> to vector<8x1xf32>
    %cst_27 = arith.constant 1.562500e-02 : f32
    %51 = vector.broadcast %cst_27 : f32 to vector<8x1xf32>
    %52 = arith.mulf %50, %51 : vector<8x1xf32>
    %53 = tpu.iota {dimensions = array<i32: 1>} : vector<1x128xi32>
    %c64_i32 = arith.constant 64 : i32
    %54 = vector.broadcast %c64_i32 : i32 to vector<1x128xi32>
    %55 = arith.cmpi slt, %53, %54 : vector<1x128xi32>
    %56 = vector.broadcast %52 : vector<8x1xf32> to vector<8x128xf32>
    %57 = arith.subf %48, %56 : vector<8x128xf32>
    %cst_28 = arith.constant 0.000000e+00 : f32
    %58 = vector.shape_cast %55 : vector<1x128xi1> to vector<1x128xi1>
    %59 = vector.broadcast %58 : vector<1x128xi1> to vector<8x128xi1>
    %60 = vector.broadcast %cst_28 : f32 to vector<8x128xf32>
    %61 = arith.select %59, %57, %60 : vector<8x128xi1>, vector<8x128xf32>
    %62 = arith.mulf %61, %61 : vector<8x128xf32>
    %cst_29 = arith.constant dense<0.000000e+00> : vector<8xf32>
    %63 = vector.multi_reduction <add>, %62, %cst_29 [1] : vector<8x128xf32> to vector<8xf32>
    %64 = vector.shape_cast %63 : vector<8xf32> to vector<8x1xf32>
    %cst_30 = arith.constant 1.562500e-02 : f32
    %65 = vector.broadcast %cst_30 : f32 to vector<8x1xf32>
    %66 = arith.mulf %64, %65 : vector<8x1xf32>
    %cst_31 = arith.constant 9.99999974E-6 : f32
    %67 = vector.broadcast %cst_31 : f32 to vector<8x1xf32>
    %68 = arith.addf %66, %67 : vector<8x1xf32>
    %69 = math.rsqrt %68 : vector<8x1xf32>
    %70 = vector.broadcast %69 : vector<8x1xf32> to vector<8x128xf32>
    %71 = arith.mulf %61, %70 : vector<8x128xf32>
    %72 = vector.broadcast %42 : vector<1x128xf32> to vector<8x128xf32>
    %73 = arith.mulf %71, %72 : vector<8x128xf32>
    %74 = vector.broadcast %43 : vector<1x128xf32> to vector<8x128xf32>
    %75 = arith.addf %73, %74 : vector<8x128xf32>
    %c0_32 = arith.constant 0 : index
    %c0_33 = arith.constant 0 : index
    %76 = vector.load %arg10[%c0_32, %c0_33] : memref<128x256xf32, #tpu.memory_space<vmem>>, vector<128x256xf32>
    %c0_34 = arith.constant 0 : index
    %c0_35 = arith.constant 0 : index
    %77 = vector.load %arg11[%c0_34, %c0_35] : memref<1x256xf32, #tpu.memory_space<vmem>>, vector<1x256xf32>
    %c0_36 = arith.constant 0 : index
    %c0_37 = arith.constant 0 : index
    %78 = vector.load %arg12[%c0_36, %c0_37] : memref<1x128xf32, #tpu.memory_space<vmem>>, vector<1x128xf32>
    %c0_38 = arith.constant 0 : index
    %c0_39 = arith.constant 0 : index
    %79 = vector.load %arg13[%c0_38, %c0_39] : memref<1x128xf32, #tpu.memory_space<vmem>>, vector<1x128xf32>
    %cst_40 = arith.constant dense<0.000000e+00> : vector<8x256xf32>
    %80 = tpu.matmul %75, %76, %cst_40 {dimension_numbers = #tpu.dot_dimension_numbers<[1], [0], [0], [1], [0, 0, 1, 1], [], []>} : vector<8x128xf32>, vector<128x256xf32>, vector<8x256xf32> -> vector<8x256xf32>
    %81 = vector.broadcast %77 : vector<1x256xf32> to vector<8x256xf32>
    %82 = arith.addf %80, %81 : vector<8x256xf32>
    %83 = vector.extract_strided_slice %82 {offsets = [0, 0], sizes = [8, 128], strides = [1, 1]} : vector<8x256xf32> to vector<8x128xf32>
    %84 = vector.extract_strided_slice %82 {offsets = [0, 128], sizes = [8, 128], strides = [1, 1]} : vector<8x256xf32> to vector<8x128xf32>
    %cst_41 = arith.constant 0.000000e+00 : f32
    %85 = vector.broadcast %cst_41 : f32 to vector<8x128xf32>
    %86 = arith.maximumf %83, %85 : vector<8x128xf32>
    %cst_42 = arith.constant dense<0.000000e+00> : vector<8xf32>
    %87 = vector.multi_reduction <add>, %86, %cst_42 [1] : vector<8x128xf32> to vector<8xf32>
    %88 = vector.shape_cast %87 : vector<8xf32> to vector<8x1xf32>
    %cst_43 = arith.constant 3.125000e-02 : f32
    %89 = vector.broadcast %cst_43 : f32 to vector<8x1xf32>
    %90 = arith.mulf %88, %89 : vector<8x1xf32>
    %91 = tpu.iota {dimensions = array<i32: 1>} : vector<1x128xi32>
    %c32_i32_44 = arith.constant 32 : i32
    %92 = vector.broadcast %c32_i32_44 : i32 to vector<1x128xi32>
    %93 = arith.cmpi slt, %91, %92 : vector<1x128xi32>
    %94 = vector.broadcast %90 : vector<8x1xf32> to vector<8x128xf32>
    %95 = arith.subf %86, %94 : vector<8x128xf32>
    %cst_45 = arith.constant 0.000000e+00 : f32
    %96 = vector.shape_cast %93 : vector<1x128xi1> to vector<1x128xi1>
    %97 = vector.broadcast %96 : vector<1x128xi1> to vector<8x128xi1>
    %98 = vector.broadcast %cst_45 : f32 to vector<8x128xf32>
    %99 = arith.select %97, %95, %98 : vector<8x128xi1>, vector<8x128xf32>
    %100 = arith.mulf %99, %99 : vector<8x128xf32>
    %cst_46 = arith.constant dense<0.000000e+00> : vector<8xf32>
    %101 = vector.multi_reduction <add>, %100, %cst_46 [1] : vector<8x128xf32> to vector<8xf32>
    %102 = vector.shape_cast %101 : vector<8xf32> to vector<8x1xf32>
    %cst_47 = arith.constant 3.125000e-02 : f32
    %103 = vector.broadcast %cst_47 : f32 to vector<8x1xf32>
    %104 = arith.mulf %102, %103 : vector<8x1xf32>
    %cst_48 = arith.constant 9.99999974E-6 : f32
    %105 = vector.broadcast %cst_48 : f32 to vector<8x1xf32>
    %106 = arith.addf %104, %105 : vector<8x1xf32>
    %107 = math.rsqrt %106 : vector<8x1xf32>
    %108 = vector.broadcast %107 : vector<8x1xf32> to vector<8x128xf32>
    %109 = arith.mulf %99, %108 : vector<8x128xf32>
    %110 = vector.broadcast %78 : vector<1x128xf32> to vector<8x128xf32>
    %111 = arith.mulf %109, %110 : vector<8x128xf32>
    %112 = vector.broadcast %79 : vector<1x128xf32> to vector<8x128xf32>
    %113 = arith.addf %111, %112 : vector<8x128xf32>
    %114 = arith.addf %113, %84 : vector<8x128xf32>
    %c0_49 = arith.constant 0 : index
    %c0_50 = arith.constant 0 : index
    %115 = vector.load %arg14[%c0_49, %c0_50] : memref<256x128xf32, #tpu.memory_space<vmem>>, vector<256x128xf32>
    %c0_51 = arith.constant 0 : index
    %c0_52 = arith.constant 0 : index
    %116 = vector.load %arg15[%c0_51, %c0_52] : memref<1x128xf32, #tpu.memory_space<vmem>>, vector<1x128xf32>
    %117 = tpu.concatenate %114, %0 in 1 : vector<8x128xf32>, vector<8x128xf32> -> vector<8x256xf32>
    %cst_53 = arith.constant dense<0.000000e+00> : vector<8x128xf32>
    %118 = tpu.matmul %117, %115, %cst_53 {dimension_numbers = #tpu.dot_dimension_numbers<[1], [0], [0], [1], [0, 0, 1, 1], [], []>} : vector<8x256xf32>, vector<256x128xf32>, vector<8x128xf32> -> vector<8x128xf32>
    %119 = vector.broadcast %116 : vector<1x128xf32> to vector<8x128xf32>
    %120 = arith.addf %118, %119 : vector<8x128xf32>
    %c0_54 = arith.constant 0 : index
    %c0_55 = arith.constant 0 : index
    %121 = vector.load %arg16[%c0_54, %c0_55] : memref<8x128xf32, #tpu.memory_space<vmem>>, vector<8x128xf32>
    tpu.vector_store %arg16[%c0_54, %c0_55], %120 {strides = array<i32>} : memref<8x128xf32, #tpu.memory_space<vmem>>, vector<8x128xf32>,
    return
  }
  func.func @transform_0(%arg0: i32) -> (i32, i32) {
    %c0_i32 = arith.constant 0 : i32
    %c0_i32_0 = arith.constant 0 : i32
    return %arg0, %c0_i32 : i32, i32
  }
  func.func @transform_1(%arg0: i32) -> (i32, i32) {
    %c0_i32 = arith.constant 0 : i32
    %c0_i32_0 = arith.constant 0 : i32
    %c0_i32_1 = arith.constant 0 : i32
    return %c0_i32, %c0_i32_0 : i32, i32
  }
  func.func @transform_2(%arg0: i32) -> (i32, i32) {
    %c0_i32 = arith.constant 0 : i32
    %c0_i32_0 = arith.constant 0 : i32
    %c0_i32_1 = arith.constant 0 : i32
    return %c0_i32, %c0_i32_0 : i32, i32
  }
  func.func @transform_3(%arg0: i32) -> (i32, i32) {
    %c0_i32 = arith.constant 0 : i32
    %c0_i32_0 = arith.constant 0 : i32
    %c0_i32_1 = arith.constant 0 : i32
    return %c0_i32, %c0_i32_0 : i32, i32
  }
  func.func @transform_4(%arg0: i32) -> (i32, i32) {
    %c0_i32 = arith.constant 0 : i32
    %c0_i32_0 = arith.constant 0 : i32
    %c0_i32_1 = arith.constant 0 : i32
    return %c0_i32, %c0_i32_0 : i32, i32
  }
  func.func @transform_5(%arg0: i32) -> (i32, i32) {
    %c0_i32 = arith.constant 0 : i32
    %c0_i32_0 = arith.constant 0 : i32
    %c0_i32_1 = arith.constant 0 : i32
    return %c0_i32, %c0_i32_0 : i32, i32
  }
  func.func @transform_6(%arg0: i32) -> (i32, i32) {
    %c0_i32 = arith.constant 0 : i32
    %c0_i32_0 = arith.constant 0 : i32
    %c0_i32_1 = arith.constant 0 : i32
    return %c0_i32, %c0_i32_0 : i32, i32
  }
  func.func @transform_7(%arg0: i32) -> (i32, i32) {
    %c0_i32 = arith.constant 0 : i32
    %c0_i32_0 = arith.constant 0 : i32
    %c0_i32_1 = arith.constant 0 : i32
    return %c0_i32, %c0_i32_0 : i32, i32
  }
  func.func @transform_8(%arg0: i32) -> (i32, i32) {
    %c0_i32 = arith.constant 0 : i32
    %c0_i32_0 = arith.constant 0 : i32
    %c0_i32_1 = arith.constant 0 : i32
    return %c0_i32, %c0_i32_0 : i32, i32
  }
  func.func @transform_9(%arg0: i32) -> (i32, i32) {
    %c0_i32 = arith.constant 0 : i32
    %c0_i32_0 = arith.constant 0 : i32
    %c0_i32_1 = arith.constant 0 : i32
    return %c0_i32, %c0_i32_0 : i32, i32
  }
  func.func @transform_10(%arg0: i32) -> (i32, i32) {
    %c0_i32 = arith.constant 0 : i32
    %c0_i32_0 = arith.constant 0 : i32
    %c0_i32_1 = arith.constant 0 : i32
    return %c0_i32, %c0_i32_0 : i32, i32
  }
  func.func @transform_11(%arg0: i32) -> (i32, i32) {
    %c0_i32 = arith.constant 0 : i32
    %c0_i32_0 = arith.constant 0 : i32
    %c0_i32_1 = arith.constant 0 : i32
    return %c0_i32, %c0_i32_0 : i32, i32
  }
  func.func @transform_12(%arg0: i32) -> (i32, i32) {
    %c0_i32 = arith.constant 0 : i32
    %c0_i32_0 = arith.constant 0 : i32
    %c0_i32_1 = arith.constant 0 : i32
    return %c0_i32, %c0_i32_0 : i32, i32
  }
  func.func @transform_13(%arg0: i32) -> (i32, i32) {
    %c0_i32 = arith.constant 0 : i32
    %c0_i32_0 = arith.constant 0 : i32
    %c0_i32_1 = arith.constant 0 : i32
    return %c0_i32, %c0_i32_0 : i32, i32
  }
  func.func @transform_14(%arg0: i32) -> (i32, i32) {
    %c0_i32 = arith.constant 0 : i32
    %c0_i32_0 = arith.constant 0 : i32
    %c0_i32_1 = arith.constant 0 : i32
    return %c0_i32, %c0_i32_0 : i32, i32
  }
  func.func @transform_15(%arg0: i32) -> (i32, i32) {
    %c0_i32 = arith.constant 0 : i32
    %c0_i32_0 = arith.constant 0 : i32
    return %arg0, %c0_i32 : i32, i32
  }
}

</mosaic_0001>

<llo_original>
// kernel: tpu_custom_call.1
$region0: #{tpu_custom_call.1}
  #allocation0 [shape = 'u32[]', space=smem, size = 0x4, offset = 0x4, fixed_abs, tag = 'smem constant byte address 0x4 - core index']
  #allocation1 [shape = 'u32[144,128]{1,0:T(1,128)}', space=vmem, size = 0x12000, scoped, tag = 'internal scratch']
  %s0 = inlined_call_operand.hbm [shape: f32[8,128], index: 0, kind: input, shape index: {}]
  %s1 = inlined_call_operand.hbm [shape: f32[128,256], index: 1, kind: input, shape index: {}]
  %s2 = inlined_call_operand.vmem [shape: f32[1,256], index: 2, kind: input, shape index: {}]
  %s3 = inlined_call_operand.vmem [shape: f32[1,128], index: 3, kind: input, shape index: {}]
  %s4 = inlined_call_operand.vmem [shape: f32[1,128], index: 4, kind: input, shape index: {}]
  %s5 = inlined_call_operand.hbm [shape: f32[128,128], index: 5, kind: input, shape index: {}]
  %s6 = inlined_call_operand.vmem [shape: f32[1,128], index: 6, kind: input, shape index: {}]
  %s7 = inlined_call_operand.vmem [shape: f32[1,128], index: 7, kind: input, shape index: {}]
  %s8 = inlined_call_operand.vmem [shape: f32[1,128], index: 8, kind: input, shape index: {}]
  %s9 = inlined_call_operand.hbm [shape: f32[128,256], index: 9, kind: input, shape index: {}]
  %s10 = inlined_call_operand.vmem [shape: f32[1,256], index: 10, kind: input, shape index: {}]
  %s11 = inlined_call_operand.vmem [shape: f32[1,128], index: 11, kind: input, shape index: {}]
  %s12 = inlined_call_operand.vmem [shape: f32[1,128], index: 12, kind: input, shape index: {}]
  %s13 = inlined_call_operand.hbm [shape: f32[256,128], index: 13, kind: input, shape index: {}]
  %s14 = inlined_call_operand.vmem [shape: f32[1,128], index: 14, kind: input, shape index: {}]
  %s15 = inlined_call_operand.hbm [shape: f32[8,128], index: 15, kind: output, shape index: {}]
  %s16 = sld [smem:[#allocation0]]
  $region90: #{tpu_custom_call.1} parent=0
    _
  %s18 = ssub.s32 1, %s16
  %s19 = scalar_select 0, %s18, %s16
  $region1: #{tpu_custom_call.1} parent=0
    #allocation2 [shape = 'u8[4096]{0}', space=vmem, size = 0x1000, scoped, tag = 'input window, operand 0, single buffered']
    #allocation3 [shape = 's32[1]{0}', space=sflag, size = 0x4, scoped, tag = 'scoped memory for tpu_custom_call.1']
    #allocation4 [shape = 's32[1]{0}', space=sflag, size = 0x4, scoped, tag = 'scoped memory for tpu_custom_call.1']
    #allocation5 [shape = 'u8[131072]{0}', space=vmem, size = 0x20000, scoped, tag = 'input window, operand 1, single buffered']
    #allocation6 [shape = 's32[1]{0}', space=sflag, size = 0x4, scoped, tag = 'scoped memory for tpu_custom_call.1']
    #allocation7 [shape = 'u8[65536]{0}', space=vmem, size = 0x10000, scoped, tag = 'input window, operand 5, single buffered']
    #allocation8 [shape = 'u8[131072]{0}', space=vmem, size = 0x20000, scoped, tag = 'input window, operand 9, single buffered']
    #allocation9 [shape = 's32[1]{0}', space=sflag, size = 0x4, scoped, tag = 'scoped memory for tpu_custom_call.1']
    #allocation10 [shape = 'u8[131072]{0}', space=vmem, size = 0x20000, scoped, tag = 'input window, operand 13, single buffered']
    #allocation11 [shape = 'u8[4096]{0}', space=vmem, size = 0x1000, scoped, tag = 'output window, operand 0, single buffered']
    %20 = vsyncpa [#allocation3], 0
    %21 = vsyncpa [#allocation6], 0
    %22 = vsyncpa [#allocation9], 0
    %23 = vsyncpa [#allocation4], 0
    // Predicated region
    $region2: #{tpu_custom_call.1} parent=1 // pred_check
      _
    $region3: #{tpu_custom_call.1} parent=1 // pred_check_branch
      %25 = sbr.rel (0) target = $region5
    $region4: #{tpu_custom_call.1} parent=1 // pred_region
      %s27 = ssub.s32 128, 128
      %28 = vsyncadd [#allocation3], %s27
      %s30 = sshll.u32 [#allocation2], 4
      %s31 = int_to_ptr.vmem [resolvable:$true] %s30
      %33 = dma.hbm_to_vmem [thread:$0]  %s0, 128, %s31, [#allocation3]
    $region5: #{tpu_custom_call.1} parent=1 // pred_fallthru
      _
    // Predicated region
    $region6: #{tpu_custom_call.1} parent=1 // pred_check
      _
    $region7: #{tpu_custom_call.1} parent=1 // pred_check_branch
      %35 = sbr.rel (0) target = $region9
    $region8: #{tpu_custom_call.1} parent=1 // pred_region
      %s37 = ssub.s32 4096, 4096
      %38 = vsyncadd [#allocation6], %s37
      %s39 = sshll.u32 [#allocation5], 4
      %s40 = int_to_ptr.vmem [resolvable:$true] %s39
      %45 = dma.hbm_to_vmem [thread:$0]  %s1, 4096, %s40, [#allocation6], 256, 256, 16
    $region9: #{tpu_custom_call.1} parent=1 // pred_fallthru
      _
    // Predicated region
    $region10: #{tpu_custom_call.1} parent=1 // pred_check
      _
    $region11: #{tpu_custom_call.1} parent=1 // pred_check_branch
      %47 = sbr.rel (0) target = $region13
    $region12: #{tpu_custom_call.1} parent=1 // pred_region
      _
    $region13: #{tpu_custom_call.1} parent=1 // pred_fallthru
      _
    // Predicated region
    $region14: #{tpu_custom_call.1} parent=1 // pred_check
      _
    $region15: #{tpu_custom_call.1} parent=1 // pred_check_branch
      %49 = sbr.rel (0) target = $region17
    $region16: #{tpu_custom_call.1} parent=1 // pred_region
      _
    $region17: #{tpu_custom_call.1} parent=1 // pred_fallthru
      _
    // Predicated region
    $region18: #{tpu_custom_call.1} parent=1 // pred_check
      _
    $region19: #{tpu_custom_call.1} parent=1 // pred_check_branch
      %51 = sbr.rel (0) target = $region21
    $region20: #{tpu_custom_call.1} parent=1 // pred_region
      _
    $region21: #{tpu_custom_call.1} parent=1 // pred_fallthru
      _
    // Predicated region
    $region22: #{tpu_custom_call.1} parent=1 // pred_check
      _
    $region23: #{tpu_custom_call.1} parent=1 // pred_check_branch
      %53 = sbr.rel (0) target = $region25
    $region24: #{tpu_custom_call.1} parent=1 // pred_region
      %s55 = ssub.s32 2048, 2048
      %56 = vsyncadd [#allocation6], %s55
      %s57 = sshll.u32 [#allocation7], 4
      %s58 = int_to_ptr.vmem [resolvable:$true] %s57
      %63 = dma.hbm_to_vmem [thread:$0]  %s5, 2048, %s58, [#allocation6], 128, 128, 8
    $region25: #{tpu_custom_call.1} parent=1 // pred_fallthru
      _
    // Predicated region
    $region26: #{tpu_custom_call.1} parent=1 // pred_check
      _
    $region27: #{tpu_custom_call.1} parent=1 // pred_check_branch
      %65 = sbr.rel (0) target = $region29
    $region28: #{tpu_custom_call.1} parent=1 // pred_region
      _
    $region29: #{tpu_custom_call.1} parent=1 // pred_fallthru
      _
    // Predicated region
    $region30: #{tpu_custom_call.1} parent=1 // pred_check
      _
    $region31: #{tpu_custom_call.1} parent=1 // pred_check_branch
      %67 = sbr.rel (0) target = $region33
    $region32: #{tpu_custom_call.1} parent=1 // pred_region
      _
    $region33: #{tpu_custom_call.1} parent=1 // pred_fallthru
      _
    // Predicated region
    $region34: #{tpu_custom_call.1} parent=1 // pred_check
      _
    $region35: #{tpu_custom_call.1} parent=1 // pred_check_branch
      %69 = sbr.rel (0) target = $region37
    $region36: #{tpu_custom_call.1} parent=1 // pred_region
      _
    $region37: #{tpu_custom_call.1} parent=1 // pred_fallthru
      _
    // Predicated region
    $region38: #{tpu_custom_call.1} parent=1 // pred_check
      _
    $region39: #{tpu_custom_call.1} parent=1 // pred_check_branch
      %71 = sbr.rel (0) target = $region41
    $region40: #{tpu_custom_call.1} parent=1 // pred_region
      %s73 = ssub.s32 4096, 4096
      %74 = vsyncadd [#allocation9], %s73
      %s75 = sshll.u32 [#allocation8], 4
      %s76 = int_to_ptr.vmem [resolvable:$true] %s75
      %81 = dma.hbm_to_vmem [thread:$0]  %s9, 4096, %s76, [#allocation9], 256, 256, 16
    $region41: #{tpu_custom_call.1} parent=1 // pred_fallthru
      _
    // Predicated region
    $region42: #{tpu_custom_call.1} parent=1 // pred_check
      _
    $region43: #{tpu_custom_call.1} parent=1 // pred_check_branch
      %83 = sbr.rel (0) target = $region45
    $region44: #{tpu_custom_call.1} parent=1 // pred_region
      _
    $region45: #{tpu_custom_call.1} parent=1 // pred_fallthru
      _
    // Predicated region
    $region46: #{tpu_custom_call.1} parent=1 // pred_check
      _
    $region47: #{tpu_custom_call.1} parent=1 // pred_check_branch
      %85 = sbr.rel (0) target = $region49
    $region48: #{tpu_custom_call.1} parent=1 // pred_region
      _
    $region49: #{tpu_custom_call.1} parent=1 // pred_fallthru
      _
    // Predicated region
    $region50: #{tpu_custom_call.1} parent=1 // pred_check
      _
    $region51: #{tpu_custom_call.1} parent=1 // pred_check_branch
      %87 = sbr.rel (0) target = $region53
    $region52: #{tpu_custom_call.1} parent=1 // pred_region
      _
    $region53: #{tpu_custom_call.1} parent=1 // pred_fallthru
      _
    // Predicated region
    $region54: #{tpu_custom_call.1} parent=1 // pred_check
      _
    $region55: #{tpu_custom_call.1} parent=1 // pred_check_branch
      %89 = sbr.rel (0) target = $region57
    $region56: #{tpu_custom_call.1} parent=1 // pred_region
      %s91 = ssub.s32 4096, 4096
      %92 = vsyncadd [#allocation9], %s91
      %s93 = sshll.u32 [#allocation10], 4
      %s94 = int_to_ptr.vmem [resolvable:$true] %s93
      %99 = dma.hbm_to_vmem [thread:$0]  %s13, 4096, %s94, [#allocation9], 128, 128, 8
    $region57: #{tpu_custom_call.1} parent=1 // pred_fallthru
      _
    // Predicated region
    $region58: #{tpu_custom_call.1} parent=1 // pred_check
      _
    $region59: #{tpu_custom_call.1} parent=1 // pred_check_branch
      %101 = sbr.rel (0) target = $region61
    $region60: #{tpu_custom_call.1} parent=1 // pred_region
      _
    $region61: #{tpu_custom_call.1} parent=1 // pred_fallthru
      _
    // Predicated region
    $region62: #{tpu_custom_call.1} parent=1 // pred_check
      _
    $region63: #{tpu_custom_call.1} parent=1 // pred_check_branch
      %103 = sbr.rel (0) target = $region65
    $region64: #{tpu_custom_call.1} parent=1 // pred_region
      %104 = dma.done [#allocation3], 128
    $region65: #{tpu_custom_call.1} parent=1 // pred_fallthru
      _
    // Predicated region
    $region66: #{tpu_custom_call.1} parent=1 // pred_check
      _
    $region67: #{tpu_custom_call.1} parent=1 // pred_check_branch
      %106 = sbr.rel (0) target = $region69
    $region68: #{tpu_custom_call.1} parent=1 // pred_region
      %107 = dma.done [#allocation6], 4096
    $region69: #{tpu_custom_call.1} parent=1 // pred_fallthru
      _
    // Predicated region
    $region70: #{tpu_custom_call.1} parent=1 // pred_check
      _
    $region71: #{tpu_custom_call.1} parent=1 // pred_check_branch
      %109 = sbr.rel (0) target = $region73
    $region72: #{tpu_custom_call.1} parent=1 // pred_region
      %110 = dma.done [#allocation6], 2048
    $region73: #{tpu_custom_call.1} parent=1 // pred_fallthru
      _
    // Predicated region
    $region74: #{tpu_custom_call.1} parent=1 // pred_check
      _
    $region75: #{tpu_custom_call.1} parent=1 // pred_check_branch
      %112 = sbr.rel (0) target = $region77
    $region76: #{tpu_custom_call.1} parent=1 // pred_region
      %113 = dma.done [#allocation9], 4096
    $region77: #{tpu_custom_call.1} parent=1 // pred_fallthru
      _
    // Predicated region
    $region78: #{tpu_custom_call.1} parent=1 // pred_check
      _
    $region79: #{tpu_custom_call.1} parent=1 // pred_check_branch
      %115 = sbr.rel (0) target = $region81
    $region80: #{tpu_custom_call.1} parent=1 // pred_region
      %116 = dma.done [#allocation9], 4096
    $region81: #{tpu_custom_call.1} parent=1 // pred_fallthru
      _
    %v117 = vld [vmem:[#allocation2] sm:$0xff]
    %v118 = vld [vmem:[#allocation5] sm:$0xff]
    %v119 = vld [vmem:[#allocation5 + $0x8] sm:$0xff]
    %v120 = vld [vmem:[#allocation5 + $0x10] sm:$0xff]
    %v121 = vld [vmem:[#allocation5 + $0x18] sm:$0xff]
    %v122 = vld [vmem:[#allocation5 + $0x20] sm:$0xff]
    %v123 = vld [vmem:[#allocation5 + $0x28] sm:$0xff]
    %v124 = vld [vmem:[#allocation5 + $0x30] sm:$0xff]
    %v125 = vld [vmem:[#allocation5 + $0x38] sm:$0xff]
    %v126 = vld [vmem:[#allocation5 + $0x40] sm:$0xff]
    %v127 = vld [vmem:[#allocation5 + $0x48] sm:$0xff]
    %v128 = vld [vmem:[#allocation5 + $0x50] sm:$0xff]
    %v129 = vld [vmem:[#allocation5 + $0x58] sm:$0xff]
    %v130 = vld [vmem:[#allocation5 + $0x60] sm:$0xff]
    %v131 = vld [vmem:[#allocation5 + $0x68] sm:$0xff]
    %v132 = vld [vmem:[#allocation5 + $0x70] sm:$0xff]
    %v133 = vld [vmem:[#allocation5 + $0x78] sm:$0xff]
    %v134 = vld [vmem:[#allocation5 + $0x80] sm:$0xff]
    %v135 = vld [vmem:[#allocation5 + $0x88] sm:$0xff]
    %v136 = vld [vmem:[#allocation5 + $0x90] sm:$0xff]
    %v137 = vld [vmem:[#allocation5 + $0x98] sm:$0xff]
    %v138 = vld [vmem:[#allocation5 + $0xa0] sm:$0xff]
    %v139 = vld [vmem:[#allocation5 + $0xa8] sm:$0xff]
    %v140 = vld [vmem:[#allocation5 + $0xb0] sm:$0xff]
    %v141 = vld [vmem:[#allocation5 + $0xb8] sm:$0xff]
    %v142 = vld [vmem:[#allocation5 + $0xc0] sm:$0xff]
    %v143 = vld [vmem:[#allocation5 + $0xc8] sm:$0xff]
    %v144 = vld [vmem:[#allocation5 + $0xd0] sm:$0xff]
    %v145 = vld [vmem:[#allocation5 + $0xd8] sm:$0xff]
    %v146 = vld [vmem:[#allocation5 + $0xe0] sm:$0xff]
    %v147 = vld [vmem:[#allocation5 + $0xe8] sm:$0xff]
    %v148 = vld [vmem:[#allocation5 + $0xf0] sm:$0xff]
    %v149 = vld [vmem:[#allocation5 + $0xf8] sm:$0xff]
    %v150 = vld [vmem:[%s2] sm:$0x3]
    %v151 = vld [vmem:[%s3] sm:$0x1]
    %v152 = vld [vmem:[%s4] sm:$0x1]
    %v154 = vlaneseq
    %v155 = vshrl.u32 %v154, 7
    %v156 = vsub.s32 0, %v155
    %v157 = vrot.slane %v150, %v156
    %v158 = vlaneseq
    %v159 = vshrl.u32 %v158, 7
    %v160 = vsub.s32 1, %v159
    %v161 = vrot.slane %v150, %v160
    %164 = vmatprep.subr.mxu0 %v149
    %165 = vmatpush1.msra.mxu0 %v148
    %166 = vmatprep.subr.mxu0 %v147
    %167 = vmatpush1.msra.mxu0 %v146
    %168 = vmatprep.subr.mxu0 %v145
    %169 = vmatpush1.msra.mxu0 %v144
    %170 = vmatprep.subr.mxu0 %v143
    %171 = vmatpush1.msra.mxu0 %v142
    %172 = vmatprep.subr.mxu0 %v141
    %173 = vmatpush1.msra.mxu0 %v140
    %174 = vmatprep.subr.mxu0 %v139
    %175 = vmatpush1.msra.mxu0 %v138
    %176 = vmatprep.subr.mxu0 %v137
    %177 = vmatpush1.msra.mxu0 %v136
    %178 = vmatprep.subr.mxu0 %v135
    %179 = vmatpush1.msra.mxu0 %v134
    %180 = vmatprep.subr.mxu0 %v133
    %181 = vmatpush1.msra.mxu0 %v132
    %182 = vmatprep.subr.mxu0 %v131
    %183 = vmatpush1.msra.mxu0 %v130
    %184 = vmatprep.subr.mxu0 %v129
    %185 = vmatpush1.msra.mxu0 %v128
    %186 = vmatprep.subr.mxu0 %v127
    %187 = vmatpush1.msra.mxu0 %v126
    %188 = vmatprep.subr.mxu0 %v125
    %189 = vmatpush1.msra.mxu0 %v124
    %190 = vmatprep.subr.mxu0 %v123
    %191 = vmatpush1.msra.mxu0 %v122
    %192 = vmatprep.subr.mxu0 %v121
    %193 = vmatpush1.msra.mxu0 %v120
    %194 = vmatprep.subr.mxu0 %v119
    %195 = vmatpush1.msra.mxu0 %v118
    %196 = vmatprep.subr.mxu0 0.0
    %197 = vmatpush2.msra.mxu0 0.0
    %198 = vmatprep.subr.mxu0 0.0
    %199 = vmatpush2.msra.mxu0 0.0
    %200 = vmatprep.subr.mxu0 0.0
    %201 = vmatpush2.msra.mxu0 0.0
    %202 = vmatprep.subr.mxu0 0.0
    %203 = vmatpush2.msra.mxu0 0.0
    %204 = vmatprep.subr.mxu0 0.0
    %205 = vmatpush2.msra.mxu0 0.0
    %206 = vmatprep.subr.mxu0 0.0
    %207 = vmatpush2.msra.mxu0 0.0
    %208 = vmatprep.subr.mxu0 0.0
    %209 = vmatpush2.msra.mxu0 0.0
    %210 = vmatprep.subr.mxu0 0.0
    %211 = vmatpush2.msra.mxu0 0.0
    %212 = vmatprep.subr.mxu0 0.0
    %213 = vmatpush2.msra.mxu0 0.0
    %214 = vmatprep.subr.mxu0 0.0
    %215 = vmatpush2.msra.mxu0 0.0
    %216 = vmatprep.subr.mxu0 0.0
    %217 = vmatpush2.msra.mxu0 0.0
    %218 = vmatprep.subr.mxu0 0.0
    %219 = vmatpush2.msra.mxu0 0.0
    %220 = vmatprep.subr.mxu0 0.0
    %221 = vmatpush2.msra.mxu0 0.0
    %222 = vmatprep.subr.mxu0 0.0
    %223 = vmatpush2.msra.mxu0 0.0
    %224 = vmatprep.subr.mxu0 0.0
    %225 = vmatpush2.msra.mxu0 0.0
    %226 = vmatprep.subr.mxu0 0.0
    %227 = vmatpush2.msra.mxu0 0.0
    %228 = vmatprep.mubr.f32.mxu0 0.0
    %229 = vmatmul.mubr.f32.gmra.mxu0 %v117
    %v230 = vpop.f32.mrf.mxu0
    %v231 = vadd.f32 %v157, %v230
    %v232 = vpop.f32.mrf.mxu0
    %v233 = vadd.f32 %v161, %v232
    %234 = vdwg.mxu0
    %v235 = vmax.f32 %v231, 0.0
    %236 = vadd.xlane.f32.xlu0 %v235
    %v237 = vpop.xlane.xlu0 %236
    %v238 = vmul.f32 %v237, 0.03125
    %v239 = vlaneseq
    %v240 = vand.u32 %v239, 127
    %vm241 = vcmp.lt.s32.totalorder %v240, 32
    %v242 = vsub.f32 %v235, %v238
    %v243 = vsel %vm241, 1, 0
    %vm244 = vcmp.eq.s32.totalorder %v243, 1
    %v245 = vsel %vm244, %v242, 0.0
    %v246 = vmul.f32 %v245, %v245
    %247 = vadd.xlane.f32.xlu0 %v246
    %v248 = vpop.xlane.xlu0 %247
    %v249 = vmul.f32 %v248, 0.03125
    %v250 = vadd.f32 %v249, 1e-05
    %v251 = vrsqrt.pop %v250
    %v252 = vmul.f32 %v245, %v251
    %v254 = vlaneseq
    %v255 = vshrl.u32 %v254, 7
    %v256 = vsub.s32 0, %v255
    %v257 = vrot.slane %v151, %v256
    %v259 = vmul.f32 %v252, %v257
    %v261 = vlaneseq
    %v262 = vshrl.u32 %v261, 7
    %v263 = vsub.s32 0, %v262
    %v264 = vrot.slane %v152, %v263
    %v266 = vadd.f32 %v259, %v264
    %v267 = vadd.f32 %v266, %v233
    %v268 = vld [vmem:[#allocation7] sm:$0xff]
    %v269 = vld [vmem:[#allocation7 + $0x8] sm:$0xff]
    %v270 = vld [vmem:[#allocation7 + $0x10] sm:$0xff]
    %v271 = vld [vmem:[#allocation7 + $0x18] sm:$0xff]
    %v272 = vld [vmem:[#allocation7 + $0x20] sm:$0xff]
    %v273 = vld [vmem:[#allocation7 + $0x28] sm:$0xff]
    %v274 = vld [vmem:[#allocation7 + $0x30] sm:$0xff]
    %v275 = vld [vmem:[#allocation7 + $0x38] sm:$0xff]
    %v276 = vld [vmem:[#allocation7 + $0x40] sm:$0xff]
    %v277 = vld [vmem:[#allocation7 + $0x48] sm:$0xff]
    %v278 = vld [vmem:[#allocation7 + $0x50] sm:$0xff]
    %v279 = vld [vmem:[#allocation7 + $0x58] sm:$0xff]
    %v280 = vld [vmem:[#allocation7 + $0x60] sm:$0xff]
    %v281 = vld [vmem:[#allocation7 + $0x68] sm:$0xff]
    %v282 = vld [vmem:[#allocation7 + $0x70] sm:$0xff]
    %v283 = vld [vmem:[#allocation7 + $0x78] sm:$0xff]
    %v284 = vld [vmem:[%s6] sm:$0x1]
    %v285 = vld [vmem:[%s7] sm:$0x1]
    %v286 = vld [vmem:[%s8] sm:$0x1]
    %v288 = vlaneseq
    %v289 = vshrl.u32 %v288, 7
    %v290 = vsub.s32 0, %v289
    %v291 = vrot.slane %v284, %v290
    %293 = vmatprep.subr.mxu0 0.0
    %294 = vmatpush1.msra.mxu0 %v283
    %295 = vmatprep.subr.mxu0 0.0
    %296 = vmatpush1.msra.mxu0 %v282
    %297 = vmatprep.subr.mxu0 0.0
    %298 = vmatpush1.msra.mxu0 %v281
    %299 = vmatprep.subr.mxu0 0.0
    %300 = vmatpush1.msra.mxu0 %v280
    %301 = vmatprep.subr.mxu0 0.0
    %302 = vmatpush1.msra.mxu0 %v279
    %303 = vmatprep.subr.mxu0 0.0
    %304 = vmatpush1.msra.mxu0 %v278
    %305 = vmatprep.subr.mxu0 0.0
    %306 = vmatpush1.msra.mxu0 %v277
    %307 = vmatprep.subr.mxu0 0.0
    %308 = vmatpush1.msra.mxu0 %v276
    %309 = vmatprep.subr.mxu0 0.0
    %310 = vmatpush1.msra.mxu0 %v275
    %311 = vmatprep.subr.mxu0 0.0
    %312 = vmatpush1.msra.mxu0 %v274
    %313 = vmatprep.subr.mxu0 0.0
    %314 = vmatpush1.msra.mxu0 %v273
    %315 = vmatprep.subr.mxu0 0.0
    %316 = vmatpush1.msra.mxu0 %v272
    %317 = vmatprep.subr.mxu0 0.0
    %318 = vmatpush1.msra.mxu0 %v271
    %319 = vmatprep.subr.mxu0 0.0
    %320 = vmatpush1.msra.mxu0 %v270
    %321 = vmatprep.subr.mxu0 0.0
    %322 = vmatpush1.msra.mxu0 %v269
    %323 = vmatprep.subr.mxu0 0.0
    %324 = vmatpush1.msra.mxu0 %v268
    %325 = vmatprep.subr.mxu0 0.0
    %326 = vmatpush2.msra.mxu0 0.0
    %327 = vmatprep.subr.mxu0 0.0
    %328 = vmatpush2.msra.mxu0 0.0
    %329 = vmatprep.subr.mxu0 0.0
    %330 = vmatpush2.msra.mxu0 0.0
    %331 = vmatprep.subr.mxu0 0.0
    %332 = vmatpush2.msra.mxu0 0.0
    %333 = vmatprep.subr.mxu0 0.0
    %334 = vmatpush2.msra.mxu0 0.0
    %335 = vmatprep.subr.mxu0 0.0
    %336 = vmatpush2.msra.mxu0 0.0
    %337 = vmatprep.subr.mxu0 0.0
    %338 = vmatpush2.msra.mxu0 0.0
    %339 = vmatprep.subr.mxu0 0.0
    %340 = vmatpush2.msra.mxu0 0.0
    %341 = vmatprep.subr.mxu0 0.0
    %342 = vmatpush2.msra.mxu0 0.0
    %343 = vmatprep.subr.mxu0 0.0
    %344 = vmatpush2.msra.mxu0 0.0
    %345 = vmatprep.subr.mxu0 0.0
    %346 = vmatpush2.msra.mxu0 0.0
    %347 = vmatprep.subr.mxu0 0.0
    %348 = vmatpush2.msra.mxu0 0.0
    %349 = vmatprep.subr.mxu0 0.0
    %350 = vmatpush2.msra.mxu0 0.0
    %351 = vmatprep.subr.mxu0 0.0
    %352 = vmatpush2.msra.mxu0 0.0
    %353 = vmatprep.subr.mxu0 0.0
    %354 = vmatpush2.msra.mxu0 0.0
    %355 = vmatprep.subr.mxu0 0.0
    %356 = vmatpush2.msra.mxu0 0.0
    %357 = vmatprep.mubr.f32.mxu0 0.0
    %358 = vmatmul.mubr.f32.gmra.mxu0 %v267
    %v359 = vpop.f32.mrf.mxu0
    %v360 = vadd.f32 %v291, %v359
    %v361 = vpop.f32.mrf.mxu0
    %362 = vdwg.mxu0
    %v363 = vmax.f32 %v360, 0.0
    %364 = vadd.xlane.f32.xlu0 %v363
    %v365 = vpop.xlane.xlu0 %364
    %v366 = vmul.f32 %v365, 0.015625
    %vm367 = vcmp.lt.s32.totalorder %v240, 64
    %v368 = vsub.f32 %v363, %v366
    %v369 = vsel %vm367, 1, 0
    %vm370 = vcmp.eq.s32.totalorder %v369, 1
    %v371 = vsel %vm370, %v368, 0.0
    %v372 = vmul.f32 %v371, %v371
    %373 = vadd.xlane.f32.xlu0 %v372
    %v374 = vpop.xlane.xlu0 %373
    %v375 = vmul.f32 %v374, 0.015625
    %v376 = vadd.f32 %v375, 1e-05
    %v377 = vrsqrt.pop %v376
    %v378 = vmul.f32 %v371, %v377
    %v380 = vlaneseq
    %v381 = vshrl.u32 %v380, 7
    %v382 = vsub.s32 0, %v381
    %v383 = vrot.slane %v285, %v382
    %v385 = vmul.f32 %v378, %v383
    %v387 = vlaneseq
    %v388 = vshrl.u32 %v387, 7
    %v389 = vsub.s32 0, %v388
    %v390 = vrot.slane %v286, %v389
    %v392 = vadd.f32 %v385, %v390
    %v393 = vld [vmem:[#allocation8] sm:$0xff]
    %v394 = vld [vmem:[#allocation8 + $0x8] sm:$0xff]
    %v395 = vld [vmem:[#allocation8 + $0x10] sm:$0xff]
    %v396 = vld [vmem:[#allocation8 + $0x18] sm:$0xff]
    %v397 = vld [vmem:[#allocation8 + $0x20] sm:$0xff]
    %v398 = vld [vmem:[#allocation8 + $0x28] sm:$0xff]
    %v399 = vld [vmem:[#allocation8 + $0x30] sm:$0xff]
    %v400 = vld [vmem:[#allocation8 + $0x38] sm:$0xff]
    %v401 = vld [vmem:[#allocation8 + $0x40] sm:$0xff]
    %v402 = vld [vmem:[#allocation8 + $0x48] sm:$0xff]
    %v403 = vld [vmem:[#allocation8 + $0x50] sm:$0xff]
    %v404 = vld [vmem:[#allocation8 + $0x58] sm:$0xff]
    %v405 = vld [vmem:[#allocation8 + $0x60] sm:$0xff]
    %v406 = vld [vmem:[#allocation8 + $0x68] sm:$0xff]
    %v407 = vld [vmem:[#allocation8 + $0x70] sm:$0xff]
    %v408 = vld [vmem:[#allocation8 + $0x78] sm:$0xff]
    %v409 = vld [vmem:[#allocation8 + $0x80] sm:$0xff]
    %v410 = vld [vmem:[#allocation8 + $0x88] sm:$0xff]
    %v411 = vld [vmem:[#allocation8 + $0x90] sm:$0xff]
    %v412 = vld [vmem:[#allocation8 + $0x98] sm:$0xff]
    %v413 = vld [vmem:[#allocation8 + $0xa0] sm:$0xff]
    %v414 = vld [vmem:[#allocation8 + $0xa8] sm:$0xff]
    %v415 = vld [vmem:[#allocation8 + $0xb0] sm:$0xff]
    %v416 = vld [vmem:[#allocation8 + $0xb8] sm:$0xff]
    %v417 = vld [vmem:[#allocation8 + $0xc0] sm:$0xff]
    %v418 = vld [vmem:[#allocation8 + $0xc8] sm:$0xff]
    %v419 = vld [vmem:[#allocation8 + $0xd0] sm:$0xff]
    %v420 = vld [vmem:[#allocation8 + $0xd8] sm:$0xff]
    %v421 = vld [vmem:[#allocation8 + $0xe0] sm:$0xff]
    %v422 = vld [vmem:[#allocation8 + $0xe8] sm:$0xff]
    %v423 = vld [vmem:[#allocation8 + $0xf0] sm:$0xff]
    %v424 = vld [vmem:[#allocation8 + $0xf8] sm:$0xff]
    %v425 = vld [vmem:[%s10] sm:$0x3]
    %v426 = vld [vmem:[%s11] sm:$0x1]
    %v427 = vld [vmem:[%s12] sm:$0x1]
    %v429 = vlaneseq
    %v430 = vshrl.u32 %v429, 7
    %v431 = vsub.s32 0, %v430
    %v432 = vrot.slane %v425, %v431
    %v433 = vlaneseq
    %v434 = vshrl.u32 %v433, 7
    %v435 = vsub.s32 1, %v434
    %v436 = vrot.slane %v425, %v435
    %439 = vmatprep.subr.mxu0 %v424
    %440 = vmatpush1.msra.mxu0 %v423
    %441 = vmatprep.subr.mxu0 %v422
    %442 = vmatpush1.msra.mxu0 %v421
    %443 = vmatprep.subr.mxu0 %v420
    %444 = vmatpush1.msra.mxu0 %v419
    %445 = vmatprep.subr.mxu0 %v418
    %446 = vmatpush1.msra.mxu0 %v417
    %447 = vmatprep.subr.mxu0 %v416
    %448 = vmatpush1.msra.mxu0 %v415
    %449 = vmatprep.subr.mxu0 %v414
    %450 = vmatpush1.msra.mxu0 %v413
    %451 = vmatprep.subr.mxu0 %v412
    %452 = vmatpush1.msra.mxu0 %v411
    %453 = vmatprep.subr.mxu0 %v410
    %454 = vmatpush1.msra.mxu0 %v409
    %455 = vmatprep.subr.mxu0 %v408
    %456 = vmatpush1.msra.mxu0 %v407
    %457 = vmatprep.subr.mxu0 %v406
    %458 = vmatpush1.msra.mxu0 %v405
    %459 = vmatprep.subr.mxu0 %v404
    %460 = vmatpush1.msra.mxu0 %v403
    %461 = vmatprep.subr.mxu0 %v402
    %462 = vmatpush1.msra.mxu0 %v401
    %463 = vmatprep.subr.mxu0 %v400
    %464 = vmatpush1.msra.mxu0 %v399
    %465 = vmatprep.subr.mxu0 %v398
    %466 = vmatpush1.msra.mxu0 %v397
    %467 = vmatprep.subr.mxu0 %v396
    %468 = vmatpush1.msra.mxu0 %v395
    %469 = vmatprep.subr.mxu0 %v394
    %470 = vmatpush1.msra.mxu0 %v393
    %471 = vmatprep.subr.mxu0 0.0
    %472 = vmatpush2.msra.mxu0 0.0
    %473 = vmatprep.subr.mxu0 0.0
    %474 = vmatpush2.msra.mxu0 0.0
    %475 = vmatprep.subr.mxu0 0.0
    %476 = vmatpush2.msra.mxu0 0.0
    %477 = vmatprep.subr.mxu0 0.0
    %478 = vmatpush2.msra.mxu0 0.0
    %479 = vmatprep.subr.mxu0 0.0
    %480 = vmatpush2.msra.mxu0 0.0
    %481 = vmatprep.subr.mxu0 0.0
    %482 = vmatpush2.msra.mxu0 0.0
    %483 = vmatprep.subr.mxu0 0.0
    %484 = vmatpush2.msra.mxu0 0.0
    %485 = vmatprep.subr.mxu0 0.0
    %486 = vmatpush2.msra.mxu0 0.0
    %487 = vmatprep.subr.mxu0 0.0
    %488 = vmatpush2.msra.mxu0 0.0
    %489 = vmatprep.subr.mxu0 0.0
    %490 = vmatpush2.msra.mxu0 0.0
    %491 = vmatprep.subr.mxu0 0.0
    %492 = vmatpush2.msra.mxu0 0.0
    %493 = vmatprep.subr.mxu0 0.0
    %494 = vmatpush2.msra.mxu0 0.0
    %495 = vmatprep.subr.mxu0 0.0
    %496 = vmatpush2.msra.mxu0 0.0
    %497 = vmatprep.subr.mxu0 0.0
    %498 = vmatpush2.msra.mxu0 0.0
    %499 = vmatprep.subr.mxu0 0.0
    %500 = vmatpush2.msra.mxu0 0.0
    %501 = vmatprep.subr.mxu0 0.0
    %502 = vmatpush2.msra.mxu0 0.0
    %503 = vmatprep.mubr.f32.mxu0 0.0
    %504 = vmatmul.mubr.f32.gmra.mxu0 %v392
    %v505 = vpop.f32.mrf.mxu0
    %v506 = vadd.f32 %v432, %v505
    %v507 = vpop.f32.mrf.mxu0
    %v508 = vadd.f32 %v436, %v507
    %509 = vdwg.mxu0
    %v510 = vmax.f32 %v506, 0.0
    %511 = vadd.xlane.f32.xlu0 %v510
    %v512 = vpop.xlane.xlu0 %511
    %v513 = vmul.f32 %v512, 0.03125
    %v514 = vsub.f32 %v510, %v513
    %v515 = vsel %vm244, %v514, 0.0
    %v516 = vmul.f32 %v515, %v515
    %517 = vadd.xlane.f32.xlu0 %v516
    %v518 = vpop.xlane.xlu0 %517
    %v519 = vmul.f32 %v518, 0.03125
    %v520 = vadd.f32 %v519, 1e-05
    %v521 = vrsqrt.pop %v520
    %v522 = vmul.f32 %v515, %v521
    %v524 = vlaneseq
    %v525 = vshrl.u32 %v524, 7
    %v526 = vsub.s32 0, %v525
    %v527 = vrot.slane %v426, %v526
    %v529 = vmul.f32 %v522, %v527
    %v531 = vlaneseq
    %v532 = vshrl.u32 %v531, 7
    %v533 = vsub.s32 0, %v532
    %v534 = vrot.slane %v427, %v533
    %v536 = vadd.f32 %v529, %v534
    %v537 = vadd.f32 %v536, %v508
    %v538 = vld [vmem:[#allocation10] sm:$0xff]
    %v539 = vld [vmem:[#allocation10 + $0x8] sm:$0xff]
    %v540 = vld [vmem:[#allocation10 + $0x10] sm:$0xff]
    %v541 = vld [vmem:[#allocation10 + $0x18] sm:$0xff]
    %v542 = vld [vmem:[#allocation10 + $0x20] sm:$0xff]
    %v543 = vld [vmem:[#allocation10 + $0x28] sm:$0xff]
    %v544 = vld [vmem:[#allocation10 + $0x30] sm:$0xff]
    %v545 = vld [vmem:[#allocation10 + $0x38] sm:$0xff]
    %v546 = vld [vmem:[#allocation10 + $0x40] sm:$0xff]
    %v547 = vld [vmem:[#allocation10 + $0x48] sm:$0xff]
    %v548 = vld [vmem:[#allocation10 + $0x50] sm:$0xff]
    %v549 = vld [vmem:[#allocation10 + $0x58] sm:$0xff]
    %v550 = vld [vmem:[#allocation10 + $0x60] sm:$0xff]
    %v551 = vld [vmem:[#allocation10 + $0x68] sm:$0xff]
    %v552 = vld [vmem:[#allocation10 + $0x70] sm:$0xff]
    %v553 = vld [vmem:[#allocation10 + $0x78] sm:$0xff]
    %v554 = vld [vmem:[#allocation10 + $0x80] sm:$0xff]
    %v555 = vld [vmem:[#allocation10 + $0x88] sm:$0xff]
    %v556 = vld [vmem:[#allocation10 + $0x90] sm:$0xff]
    %v557 = vld [vmem:[#allocation10 + $0x98] sm:$0xff]
    %v558 = vld [vmem:[#allocation10 + $0xa0] sm:$0xff]
    %v559 = vld [vmem:[#allocation10 + $0xa8] sm:$0xff]
    %v560 = vld [vmem:[#allocation10 + $0xb0] sm:$0xff]
    %v561 = vld [vmem:[#allocation10 + $0xb8] sm:$0xff]
    %v562 = vld [vmem:[#allocation10 + $0xc0] sm:$0xff]
    %v563 = vld [vmem:[#allocation10 + $0xc8] sm:$0xff]
    %v564 = vld [vmem:[#allocation10 + $0xd0] sm:$0xff]
    %v565 = vld [vmem:[#allocation10 + $0xd8] sm:$0xff]
    %v566 = vld [vmem:[#allocation10 + $0xe0] sm:$0xff]
    %v567 = vld [vmem:[#allocation10 + $0xe8] sm:$0xff]
    %v568 = vld [vmem:[#allocation10 + $0xf0] sm:$0xff]
    %v569 = vld [vmem:[#allocation10 + $0xf8] sm:$0xff]
    %v570 = vld [vmem:[%s14] sm:$0x1]
    %v572 = vlaneseq
    %v573 = vshrl.u32 %v572, 7
    %v574 = vsub.s32 0, %v573
    %v575 = vrot.slane %v570, %v574
    %577 = vmatprep.subr.mxu0 0.0
    %578 = vmatpush1.msra.mxu0 %v553
    %579 = vmatprep.subr.mxu0 0.0
    %580 = vmatpush1.msra.mxu0 %v552
    %581 = vmatprep.subr.mxu0 0.0
    %582 = vmatpush1.msra.mxu0 %v551
    %583 = vmatprep.subr.mxu0 0.0
    %584 = vmatpush1.msra.mxu0 %v550
    %585 = vmatprep.subr.mxu0 0.0
    %586 = vmatpush1.msra.mxu0 %v549
    %587 = vmatprep.subr.mxu0 0.0
    %588 = vmatpush1.msra.mxu0 %v548
    %589 = vmatprep.subr.mxu0 0.0
    %590 = vmatpush1.msra.mxu0 %v547
    %591 = vmatprep.subr.mxu0 0.0
    %592 = vmatpush1.msra.mxu0 %v546
    %593 = vmatprep.subr.mxu0 0.0
    %594 = vmatpush1.msra.mxu0 %v545
    %595 = vmatprep.subr.mxu0 0.0
    %596 = vmatpush1.msra.mxu0 %v544
    %597 = vmatprep.subr.mxu0 0.0
    %598 = vmatpush1.msra.mxu0 %v543
    %599 = vmatprep.subr.mxu0 0.0
    %600 = vmatpush1.msra.mxu0 %v542
    %601 = vmatprep.subr.mxu0 0.0
    %602 = vmatpush1.msra.mxu0 %v541
    %603 = vmatprep.subr.mxu0 0.0
    %604 = vmatpush1.msra.mxu0 %v540
    %605 = vmatprep.subr.mxu0 0.0
    %606 = vmatpush1.msra.mxu0 %v539
    %607 = vmatprep.subr.mxu0 0.0
    %608 = vmatpush1.msra.mxu0 %v538
    %609 = vmatprep.subr.mxu0 0.0
    %610 = vmatpush2.msra.mxu0 %v569
    %611 = vmatprep.subr.mxu0 0.0
    %612 = vmatpush2.msra.mxu0 %v568
    %613 = vmatprep.subr.mxu0 0.0
    %614 = vmatpush2.msra.mxu0 %v567
    %615 = vmatprep.subr.mxu0 0.0
    %616 = vmatpush2.msra.mxu0 %v566
    %617 = vmatprep.subr.mxu0 0.0
    %618 = vmatpush2.msra.mxu0 %v565
    %619 = vmatprep.subr.mxu0 0.0
    %620 = vmatpush2.msra.mxu0 %v564
    %621 = vmatprep.subr.mxu0 0.0
    %622 = vmatpush2.msra.mxu0 %v563
    %623 = vmatprep.subr.mxu0 0.0
    %624 = vmatpush2.msra.mxu0 %v562
    %625 = vmatprep.subr.mxu0 0.0
    %626 = vmatpush2.msra.mxu0 %v561
    %627 = vmatprep.subr.mxu0 0.0
    %628 = vmatpush2.msra.mxu0 %v560
    %629 = vmatprep.subr.mxu0 0.0
    %630 = vmatpush2.msra.mxu0 %v559
    %631 = vmatprep.subr.mxu0 0.0
    %632 = vmatpush2.msra.mxu0 %v558
    %633 = vmatprep.subr.mxu0 0.0
    %634 = vmatpush2.msra.mxu0 %v557
    %635 = vmatprep.subr.mxu0 0.0
    %636 = vmatpush2.msra.mxu0 %v556
    %637 = vmatprep.subr.mxu0 0.0
    %638 = vmatpush2.msra.mxu0 %v555
    %639 = vmatprep.subr.mxu0 0.0
    %640 = vmatpush2.msra.mxu0 %v554
    %641 = vmatprep.mubr.f32.mxu0 %v117
    %642 = vmatmul.mubr.f32.gmra.mxu0 %v537
    %v643 = vpop.f32.mrf.mxu0
    %v644 = vadd.f32 %v575, %v643
    %v645 = vpop.f32.mrf.mxu0
    %646 = vdwg.mxu0
    %647 = vst [vmem:[#allocation11] sm:$0xff] %v644
    // Predicated region
    $region82: #{tpu_custom_call.1} parent=1 // pred_check
      _
    $region83: #{tpu_custom_call.1} parent=1 // pred_check_branch
      %649 = sbr.rel (0) target = $region85
    $region84: #{tpu_custom_call.1} parent=1 // pred_region
      %s651 = ssub.s32 128, 128
      %652 = vsyncadd [#allocation4], %s651
      %s654 = sshll.u32 [#allocation11], 4
      %s655 = int_to_ptr.vmem [resolvable:$true] %s654
      %657 = dma.vmem_to_hbm [thread:$0]  %s655, 128, %s15, [#allocation4]
    $region85: #{tpu_custom_call.1} parent=1 // pred_fallthru
      _
    // Predicated region
    $region86: #{tpu_custom_call.1} parent=1 // pred_check
      _
    $region87: #{tpu_custom_call.1} parent=1 // pred_check_branch
      %659 = sbr.rel (0) target = $region89
    $region88: #{tpu_custom_call.1} parent=1 // pred_region
      %660 = dma.done [#allocation4], 128
    $region89: #{tpu_custom_call.1} parent=1 // pred_fallthru
      _
    %661 = vsyncpa [#allocation3], 1
    %662 = vsyncpa [#allocation6], 1
    %663 = vsyncpa [#allocation9], 1
    %664 = vsyncpa [#allocation4], 1

</llo_original>
